<compile_context>
chip_gen: v7x
topology: tpu7x:2x2x1
jax: 0.10.0
libtpu: 0.0.40
codegen_flags: <defaults>
</compile_context>

<pallas_src>
import functools

import jax
import jax.numpy as jnp
from jax import lax
from jax.experimental import pallas as pl
from jax.experimental.pallas import tpu as pltpu

MODAL_HIDDEN = 30  # fixed by the module (modal1_hidden = modal2_hidden = 30)
LANE = 128         # TPU vreg lane width; each projection half is padded to a lane boundary


def _infonce_kernel(x_ref, w_ref, logits_ref, loss_ref, *, hpad, inv_t, inv_t_sq):
    x = x_ref[...]          # (N, L, D1+D2) f32 -- fused [query | positive]
    w = w_ref[...]          # (D1+D2, 2*hpad) f32 -- block-diagonal, pre-scaled by 1/L

    # mean_L(conv1d_k1(.)) == (sum_L(.)) @ (W / L): cheap sublane reduce, then one MXU matmul
    # producing [proj_q | 0-pad | proj_p | 0-pad] in a single pass.
    x_sum = jnp.sum(x, axis=1)                                           # (N, D1+D2)
    proj = jnp.dot(x_sum, w, preferred_element_type=jnp.float32)         # (N, 2*hpad)
    proj_q = proj[:, :hpad]          # 128-lane aligned split (free)
    proj_p = proj[:, hpad:]

    # F.normalize(dim=-1): rsqrt (EUP) * mul; clamping the squared norm at 1e-24 is equivalent
    # to torch's max(norm, 1e-12).  Zero-padded lanes contribute nothing to the sums.
    inv_q = lax.rsqrt(jnp.maximum(jnp.sum(proj_q * proj_q, axis=-1, keepdims=True), 1e-24))
    inv_p = lax.rsqrt(jnp.maximum(jnp.sum(proj_p * proj_p, axis=-1, keepdims=True), 1e-24))
    qn = proj_q * inv_q
    pn = proj_p * inv_p

    # logits = (qn @ pn.T) * (1/T)  (MXU, trans_b via dot_general; padded lanes are zero).
    raw = lax.dot_general(
        qn, pn, dimension_numbers=(((1,), (1,)), ((), ())),
        preferred_element_type=jnp.float32,
    )                                                                    # (N, N)
    logits_ref[...] = (raw * inv_t).astype(logits_ref.dtype)

    # cross_entropy(logits / T, arange(N), 'mean')  ==  mean(lse - diag) on  raw * (1/T^2).
    scaled = raw * inv_t_sq
    diag = jnp.sum(qn * pn, axis=-1, keepdims=True) * inv_t_sq           # (N,1) == diag(scaled)
    m = jnp.max(scaled, axis=-1, keepdims=True)
    lse = jnp.log(jnp.sum(jnp.exp(scaled - m), axis=-1, keepdims=True)) + m
    loss_ref[...] = jnp.mean(lse - diag, keepdims=True)                  # (1, 1)


def infonce_forward(query, positive_key, w_query, w_positive, temperature=0.1):
    """query: (N, L, D1), positive_key: (N, L, D2), w_*: (D_in, 30). Returns (loss, logits)."""
    n, l, d1 = query.shape
    d2 = positive_key.shape[-1]
    h = w_query.shape[-1]
    hpad = max(LANE, ((h + LANE - 1) // LANE) * LANE)

    # Fuse the two modalities: one activation tensor + one block-diagonal weight (1/L folded in),
    # with the two output halves 128-lane aligned so the in-kernel split is free.
    x = jnp.concatenate(
        [query.astype(jnp.float32), positive_key.astype(jnp.float32)], axis=-1)  # (N, L, D1+D2)
    inv_l = 1.0 / l
    w = jnp.zeros((d1 + d2, 2 * hpad), jnp.float32)
    w = w.at[:d1, :h].set(w_query.astype(jnp.float32) * inv_l)
    w = w.at[d1:, hpad:hpad + h].set(w_positive.astype(jnp.float32) * inv_l)

    cost = pl.CostEstimate(
        flops=int(n * l * (d1 + d2)                  # sequence sum
                  + 2 * n * (d1 + d2) * 2 * hpad     # fused projection matmul
                  + 2 * n * hpad * n                 # logits matmul
                  + 10 * n * hpad + 8 * n * n),      # normalize / softmax elementwise
        transcendentals=int(n * n + 3 * n),
        bytes_accessed=int(x.size * 4 + w.size * 4 + n * n * 4 + 4),
    )

    kernel = functools.partial(
        _infonce_kernel, hpad=hpad,
        inv_t=1.0 / temperature, inv_t_sq=1.0 / (temperature * temperature))

    logits, loss = pl.pallas_call(
        kernel,
        out_shape=(
            jax.ShapeDtypeStruct((n, n), jnp.float32),   # logits
            jax.ShapeDtypeStruct((1, 1), jnp.float32),   # loss (scalar, kept 2D for VMEM)
        ),
        in_specs=[
            pl.BlockSpec(memory_space=pltpu.MemorySpace.VMEM),
            pl.BlockSpec(memory_space=pltpu.MemorySpace.VMEM),
        ],
        out_specs=(
            pl.BlockSpec(memory_space=pltpu.MemorySpace.VMEM),
            pl.BlockSpec(memory_space=pltpu.MemorySpace.VMEM),
        ),
        cost_estimate=cost,
    )(x, w)
    return loss[0, 0], logits


def _reference(query, positive_key, w_query, w_positive, temperature):
    """Pure-JAX re-statement of the PyTorch forward (eval mode, dropout p=0)."""
    # Conv1d(k=1) per timestep, then mean over seq (project-then-mean, as in torch).
    proj_q = jnp.mean(jnp.einsum("nld,dh->nlh", query, w_query), axis=1)
    proj_p = jnp.mean(jnp.einsum("nld,dh->nlh", positive_key, w_positive), axis=1)
    qn = proj_q / jnp.maximum(jnp.linalg.norm(proj_q, axis=-1, keepdims=True), 1e-12)
    pn = proj_p / jnp.maximum(jnp.linalg.norm(proj_p, axis=-1, keepdims=True), 1e-12)
    logits = (qn @ pn.T) / temperature
    scaled = logits / temperature
    logp = jax.nn.log_softmax(scaled, axis=-1)
    n = logits.shape[0]
    loss = -jnp.mean(logp[jnp.arange(n), jnp.arange(n)])
    return loss, logits


if __name__ == "__main__":
    # Small shapes consistent with the module: batch N=8, seq L=12,
    # modal1_dim_in=20, modal2_dim_in=40, hidden=30 (fixed in __init__).
    N, L, D1, D2, H = 8, 12, 20, 40, MODAL_HIDDEN
    key = jax.random.PRNGKey(0)
    k1, k2, k3, k4 = jax.random.split(key, 4)

    query = jax.random.normal(k1, (N, L, D1), jnp.float32)
    positive = jax.random.normal(k2, (N, L, D2), jnp.float32)

    # Deterministic Conv1d(k=1, bias=False) weights, stored as (D_in, H) == W_torch[:, :, 0].T
    # (uniform in +-1/sqrt(fan_in), same scale family as nn.Conv1d default init).
    w_query = jax.random.uniform(k3, (D1, H), jnp.float32, -1.0 / D1 ** 0.5, 1.0 / D1 ** 0.5)
    w_positive = jax.random.uniform(k4, (D2, H), jnp.float32, -1.0 / D2 ** 0.5, 1.0 / D2 ** 0.5)

    # TODO(synk): F.dropout in training mode is not modeled; embed_dropout=0 / eval semantics used.
    loss, logits = infonce_forward(query, positive, w_query, w_positive, temperature=0.1)
    jax.block_until_ready((loss, logits))

    ref_loss, ref_logits = _reference(query, positive, w_query, w_positive, 0.1)
    assert logits.shape == (N, N)
    assert jnp.allclose(logits, ref_logits, rtol=1e-5, atol=1e-5), "logits mismatch"
    assert jnp.allclose(loss, ref_loss, rtol=1e-5, atol=1e-5), "loss mismatch"

    print("KERNEL_OK")
</pallas_src>

<mosaic_0001>
module attributes {stable_mosaic.version = 11 : i64} {
  func.func @_infonce_kernel(%arg0: memref<8x12x60xf32, #tpu.memory_space<vmem>>, %arg1: memref<60x256xf32, #tpu.memory_space<vmem>>, %arg2: memref<8x8xf32, #tpu.memory_space<vmem>>, %arg3: memref<1x1xf32, #tpu.memory_space<vmem>>) attributes {dimension_semantics = [], scalar_prefetch = 0 : i64, scratch_operands = 0 : i64, tpu.core_type = #tpu.core_type<tc>} {
    %c0 = arith.constant 0 : index
    %c0_0 = arith.constant 0 : index
    %c0_1 = arith.constant 0 : index
    %0 = vector.load %arg0[%c0, %c0_0, %c0_1] : memref<8x12x60xf32, #tpu.memory_space<vmem>>, vector<8x12x60xf32>
    %c0_2 = arith.constant 0 : index
    %c0_3 = arith.constant 0 : index
    %1 = vector.load %arg1[%c0_2, %c0_3] : memref<60x256xf32, #tpu.memory_space<vmem>>, vector<60x256xf32>
    %cst = arith.constant dense<0.000000e+00> : vector<8x60xf32>
    %2 = vector.multi_reduction <add>, %0, %cst [1] : vector<8x12x60xf32> to vector<8x60xf32>
    %cst_4 = arith.constant dense<0.000000e+00> : vector<8x256xf32>
    %3 = tpu.matmul %2, %1, %cst_4 {dimension_numbers = #tpu.dot_dimension_numbers<[1], [0], [0], [1], [0, 0, 1, 1], [], []>} : vector<8x60xf32>, vector<60x256xf32>, vector<8x256xf32> -> vector<8x256xf32>
    %4 = vector.extract_strided_slice %3 {offsets = [0, 0], sizes = [8, 128], strides = [1, 1]} : vector<8x256xf32> to vector<8x128xf32>
    %5 = vector.extract_strided_slice %3 {offsets = [0, 128], sizes = [8, 128], strides = [1, 1]} : vector<8x256xf32> to vector<8x128xf32>
    %6 = arith.mulf %4, %4 : vector<8x128xf32>
    %cst_5 = arith.constant dense<0.000000e+00> : vector<8xf32>
    %7 = vector.multi_reduction <add>, %6, %cst_5 [1] : vector<8x128xf32> to vector<8xf32>
    %8 = vector.shape_cast %7 : vector<8xf32> to vector<8x1xf32>
    %cst_6 = arith.constant 1.000000e-24 : f32
    %9 = vector.broadcast %cst_6 : f32 to vector<8x1xf32>
    %10 = arith.maximumf %8, %9 : vector<8x1xf32>
    %11 = math.rsqrt %10 : vector<8x1xf32>
    %12 = arith.mulf %5, %5 : vector<8x128xf32>
    %cst_7 = arith.constant dense<0.000000e+00> : vector<8xf32>
    %13 = vector.multi_reduction <add>, %12, %cst_7 [1] : vector<8x128xf32> to vector<8xf32>
    %14 = vector.shape_cast %13 : vector<8xf32> to vector<8x1xf32>
    %cst_8 = arith.constant 1.000000e-24 : f32
    %15 = vector.broadcast %cst_8 : f32 to vector<8x1xf32>
    %16 = arith.maximumf %14, %15 : vector<8x1xf32>
    %17 = math.rsqrt %16 : vector<8x1xf32>
    %18 = vector.broadcast %11 : vector<8x1xf32> to vector<8x128xf32>
    %19 = arith.mulf %4, %18 : vector<8x128xf32>
    %20 = vector.broadcast %17 : vector<8x1xf32> to vector<8x128xf32>
    %21 = arith.mulf %5, %20 : vector<8x128xf32>
    %cst_9 = arith.constant dense<0.000000e+00> : vector<8x8xf32>
    %22 = tpu.matmul %19, %21, %cst_9 {dimension_numbers = #tpu.dot_dimension_numbers<[1], [1], [0], [0], [0, 0, 1, 0], [], []>} : vector<8x128xf32>, vector<8x128xf32>, vector<8x8xf32> -> vector<8x8xf32>
    %cst_10 = arith.constant 1.000000e+01 : f32
    %23 = vector.broadcast %cst_10 : f32 to vector<8x8xf32>
    %24 = arith.mulf %22, %23 : vector<8x8xf32>
    %c0_11 = arith.constant 0 : index
    %c0_12 = arith.constant 0 : index
    %25 = vector.load %arg2[%c0_11, %c0_12] : memref<8x8xf32, #tpu.memory_space<vmem>>, vector<8x8xf32>
    tpu.vector_store %arg2[%c0_11, %c0_12], %24 {strides = array<i32>} : memref<8x8xf32, #tpu.memory_space<vmem>>, vector<8x8xf32>,
    %cst_13 = arith.constant 1.000000e+02 : f32
    %26 = vector.broadcast %cst_13 : f32 to vector<8x8xf32>
    %27 = arith.mulf %22, %26 : vector<8x8xf32>
    %28 = arith.mulf %19, %21 : vector<8x128xf32>
    %cst_14 = arith.constant dense<0.000000e+00> : vector<8xf32>
    %29 = vector.multi_reduction <add>, %28, %cst_14 [1] : vector<8x128xf32> to vector<8xf32>
    %30 = vector.shape_cast %29 : vector<8xf32> to vector<8x1xf32>
    %cst_15 = arith.constant 1.000000e+02 : f32
    %31 = vector.broadcast %cst_15 : f32 to vector<8x1xf32>
    %32 = arith.mulf %30, %31 : vector<8x1xf32>
    %cst_16 = arith.constant dense<0xFF800000> : vector<8xf32>
    %33 = vector.multi_reduction <maximumf>, %27, %cst_16 [1] : vector<8x8xf32> to vector<8xf32>
    %34 = vector.shape_cast %33 : vector<8xf32> to vector<8x1xf32>
    %35 = vector.broadcast %34 : vector<8x1xf32> to vector<8x8xf32>
    %36 = arith.subf %27, %35 : vector<8x8xf32>
    %37 = math.exp %36 : vector<8x8xf32>
    %cst_17 = arith.constant dense<0.000000e+00> : vector<8xf32>
    %38 = vector.multi_reduction <add>, %37, %cst_17 [1] : vector<8x8xf32> to vector<8xf32>
    %39 = vector.shape_cast %38 : vector<8xf32> to vector<8x1xf32>
    %40 = math.log %39 : vector<8x1xf32>
    %41 = arith.addf %40, %34 : vector<8x1xf32>
    %42 = arith.subf %41, %32 : vector<8x1xf32>
    %43 = vector.shape_cast %42 : vector<8x1xf32> to vector<1x8x1xf32>
    %cst_18 = arith.constant dense<0.000000e+00> : vector<1xf32>
    %44 = vector.multi_reduction <add>, %43, %cst_18 [1, 2] : vector<1x8x1xf32> to vector<1xf32>
    %45 = vector.shape_cast %44 : vector<1xf32> to vector<1x1x1xf32>
    %46 = vector.extract %45[0, 0, 0] : f32 from vector<1x1x1xf32>
    %47 = vector.broadcast %46 : f32 to vector<1x1xf32>
    %cst_19 = arith.constant 8.000000e+00 : f32
    %48 = vector.broadcast %cst_19 : f32 to vector<1x1xf32>
    %49 = arith.divf %47, %48 : vector<1x1xf32>
    %c0_20 = arith.constant 0 : index
    %c0_21 = arith.constant 0 : index
    %50 = vector.load %arg3[%c0_20, %c0_21] : memref<1x1xf32, #tpu.memory_space<vmem>>, vector<1x1xf32>
    tpu.vector_store %arg3[%c0_20, %c0_21], %49 {strides = array<i32>} : memref<1x1xf32, #tpu.memory_space<vmem>>, vector<1x1xf32>,
    return
  }
}

</mosaic_0001>

<llo_original>
// kernel: tpu_custom_call.1
$region0: #{tpu_custom_call.1}
  #allocation0 [shape = 'u32[]', space=smem, size = 0x4, offset = 0x4, fixed_abs, tag = 'smem constant byte address 0x4 - core index']
  #allocation1 [shape = 'u32[144,128]{1,0:T(1,128)}', space=vmem, size = 0x12000, scoped, tag = 'internal scratch']
  %s0 = inlined_call_operand.vmem [shape: f32[8,12,60], index: 0, kind: input, shape index: {}]
  %s1 = inlined_call_operand.vmem [shape: f32[60,256], index: 1, kind: input, shape index: {}]
  %s2 = inlined_call_operand.hbm [shape: f32[8,8], index: 2, kind: output, shape index: {0}]
  %s3 = inlined_call_operand.hbm [shape: f32[1,1], index: 3, kind: output, shape index: {1}]
  %4 = xla_tuple %s2, %s3
  %s5 = sld [smem:[#allocation0]]
  $region26: #{tpu_custom_call.1} parent=0
    _
  %s7 = ssub.s32 1, %s5
  %s8 = scalar_select 0, %s7, %s5
  $region1: #{tpu_custom_call.1} parent=0
    #allocation2 [shape = 'u8[4096]{0}', space=vmem, size = 0x1000, scoped, tag = 'output window, operand 0, single buffered']
    #allocation3 [shape = 's32[1]{0}', space=sflag, size = 0x4, scoped, tag = 'scoped memory for tpu_custom_call.1']
    #allocation4 [shape = 'u8[512]{0}', space=vmem, size = 0x400, scoped, tag = 'output window, operand 1, single buffered']
    #allocation5 [shape = 's32[1]{0}', space=sflag, size = 0x4, scoped, tag = 'scoped memory for tpu_custom_call.1']
    %9 = vsyncpa [#allocation3], 0
    %10 = vsyncpa [#allocation5], 0
    // Predicated region
    $region2: #{tpu_custom_call.1} parent=1 // pred_check
      _
    $region3: #{tpu_custom_call.1} parent=1 // pred_check_branch
      %12 = sbr.rel (0) target = $region5
    $region4: #{tpu_custom_call.1} parent=1 // pred_region
      _
    $region5: #{tpu_custom_call.1} parent=1 // pred_fallthru
      _
    // Predicated region
    $region6: #{tpu_custom_call.1} parent=1 // pred_check
      _
    $region7: #{tpu_custom_call.1} parent=1 // pred_check_branch
      %14 = sbr.rel (0) target = $region9
    $region8: #{tpu_custom_call.1} parent=1 // pred_region
      _
    $region9: #{tpu_custom_call.1} parent=1 // pred_fallthru
      _
    %v15 = vld [vmem:[%s0] sm:$0xff]
    %v16 = vld [vmem:[%s0 + $0x8] sm:$0xf]
    %v17 = vld [vmem:[%s0 + $0x10] sm:$0xff]
    %v18 = vld [vmem:[%s0 + $0x18] sm:$0xf]
    %v19 = vld [vmem:[%s0 + $0x20] sm:$0xff]
    %v20 = vld [vmem:[%s0 + $0x28] sm:$0xf]
    %v21 = vld [vmem:[%s0 + $0x30] sm:$0xff]
    %v22 = vld [vmem:[%s0 + $0x38] sm:$0xf]
    %v23 = vld [vmem:[%s0 + $0x40] sm:$0xff]
    %v24 = vld [vmem:[%s0 + $0x48] sm:$0xf]
    %v25 = vld [vmem:[%s0 + $0x50] sm:$0xff]
    %v26 = vld [vmem:[%s0 + $0x58] sm:$0xf]
    %v27 = vld [vmem:[%s0 + $0x60] sm:$0xff]
    %v28 = vld [vmem:[%s0 + $0x68] sm:$0xf]
    %v29 = vld [vmem:[%s0 + $0x70] sm:$0xff]
    %v30 = vld [vmem:[%s0 + $0x78] sm:$0xf]
    %v31 = vld [vmem:[%s1] sm:$0xff]
    %v32 = vld [vmem:[%s1 + $0x8] sm:$0xff]
    %v33 = vld [vmem:[%s1 + $0x10] sm:$0xff]
    %v34 = vld [vmem:[%s1 + $0x18] sm:$0xff]
    %v35 = vld [vmem:[%s1 + $0x20] sm:$0xff]
    %v36 = vld [vmem:[%s1 + $0x28] sm:$0xff]
    %v37 = vld [vmem:[%s1 + $0x30] sm:$0xff]
    %v38 = vld [vmem:[%s1 + $0x38] sm:$0xff]
    %v39 = vld [vmem:[%s1 + $0x40] sm:$0xff]
    %v40 = vld [vmem:[%s1 + $0x48] sm:$0xff]
    %v41 = vld [vmem:[%s1 + $0x50] sm:$0xff]
    %v42 = vld [vmem:[%s1 + $0x58] sm:$0xff]
    %v43 = vld [vmem:[%s1 + $0x60] sm:$0xff]
    %v44 = vld [vmem:[%s1 + $0x68] sm:$0xff]
    %v45 = vld [vmem:[%s1 + $0x70] sm:$0xf]
    %v46 = vld [vmem:[%s1 + $0x78] sm:$0xf]
    %vm47 = vcmask 490496
    %v48 = vsel %vm47, %v15, 0.0
    %vm49 = vcmask 486400
    %v50 = vsel %vm49, %v16, 0.0
    %v51 = vadd.f32 %v48, %v50
    %v52 = vrot.slane %v51, 4
    %v53 = vadd.f32 %v51, %v52
    %v54 = vrot.slane %v53, 2
    %v55 = vadd.f32 %v53, %v54
    %v56 = vrot.slane %v55, 1
    %v57 = vadd.f32 %v55, %v56
    %v58 = vsel %vm47, %v17, 0.0
    %v59 = vsel %vm49, %v18, 0.0
    %v60 = vadd.f32 %v58, %v59
    %v61 = vrot.slane %v60, 4
    %v62 = vadd.f32 %v60, %v61
    %v63 = vrot.slane %v62, 2
    %v64 = vadd.f32 %v62, %v63
    %v65 = vrot.slane %v64, 1
    %v66 = vadd.f32 %v64, %v65
    %v67 = vsel %vm47, %v19, 0.0
    %v68 = vsel %vm49, %v20, 0.0
    %v69 = vadd.f32 %v67, %v68
    %v70 = vrot.slane %v69, 4
    %v71 = vadd.f32 %v69, %v70
    %v72 = vrot.slane %v71, 2
    %v73 = vadd.f32 %v71, %v72
    %v74 = vrot.slane %v73, 1
    %v75 = vadd.f32 %v73, %v74
    %v76 = vsel %vm47, %v21, 0.0
    %v77 = vsel %vm49, %v22, 0.0
    %v78 = vadd.f32 %v76, %v77
    %v79 = vrot.slane %v78, 4
    %v80 = vadd.f32 %v78, %v79
    %v81 = vrot.slane %v80, 2
    %v82 = vadd.f32 %v80, %v81
    %v83 = vrot.slane %v82, 1
    %v84 = vadd.f32 %v82, %v83
    %v85 = vsel %vm47, %v23, 0.0
    %v86 = vsel %vm49, %v24, 0.0
    %v87 = vadd.f32 %v85, %v86
    %v88 = vrot.slane %v87, 4
    %v89 = vadd.f32 %v87, %v88
    %v90 = vrot.slane %v89, 2
    %v91 = vadd.f32 %v89, %v90
    %v92 = vrot.slane %v91, 1
    %v93 = vadd.f32 %v91, %v92
    %v94 = vsel %vm47, %v25, 0.0
    %v95 = vsel %vm49, %v26, 0.0
    %v96 = vadd.f32 %v94, %v95
    %v97 = vrot.slane %v96, 4
    %v98 = vadd.f32 %v96, %v97
    %v99 = vrot.slane %v98, 2
    %v100 = vadd.f32 %v98, %v99
    %v101 = vrot.slane %v100, 1
    %v102 = vadd.f32 %v100, %v101
    %v103 = vsel %vm47, %v27, 0.0
    %v104 = vsel %vm49, %v28, 0.0
    %v105 = vadd.f32 %v103, %v104
    %v106 = vrot.slane %v105, 4
    %v107 = vadd.f32 %v105, %v106
    %v108 = vrot.slane %v107, 2
    %v109 = vadd.f32 %v107, %v108
    %v110 = vrot.slane %v109, 1
    %v111 = vadd.f32 %v109, %v110
    %v112 = vsel %vm47, %v29, 0.0
    %v113 = vsel %vm49, %v30, 0.0
    %v114 = vadd.f32 %v112, %v113
    %v115 = vrot.slane %v114, 4
    %v116 = vadd.f32 %v114, %v115
    %v117 = vrot.slane %v116, 2
    %v118 = vadd.f32 %v116, %v117
    %v119 = vrot.slane %v118, 1
    %v120 = vadd.f32 %v118, %v119
    %vm129 = vcmask 1041409
    %v130 = vsel %vm129, %v66, %v57
    %vm131 = vcmask 1042434
    %v132 = vsel %vm131, %v75, %v130
    %vm133 = vcmask 1043459
    %v134 = vsel %vm133, %v84, %v132
    %vm135 = vcmask 1044484
    %v136 = vsel %vm135, %v93, %v134
    %vm137 = vcmask 1045509
    %v138 = vsel %vm137, %v102, %v136
    %vm139 = vcmask 1046534
    %v140 = vsel %vm139, %v111, %v138
    %vm141 = vcmask 1047559
    %v142 = vsel %vm141, %v120, %v140
    %v143 = vsel %vm47, %v142, 0
    %vm145 = vcmask 1043456
    %v147 = vsel %vm145, %v45, 0
    %v150 = vsel %vm145, %v46, 0
    %152 = vmatprep.subr.mxu0 %v32
    %153 = vmatpush1.msra.mxu0 %v31
    %154 = vmatprep.subr.mxu0 %v34
    %155 = vmatpush1.msra.mxu0 %v33
    %156 = vmatprep.subr.mxu0 %v36
    %157 = vmatpush1.msra.mxu0 %v35
    %158 = vmatprep.subr.mxu0 %v38
    %159 = vmatpush1.msra.mxu0 %v37
    %160 = vmatprep.subr.mxu0 %v40
    %161 = vmatpush1.msra.mxu0 %v39
    %162 = vmatprep.subr.mxu0 %v42
    %163 = vmatpush1.msra.mxu0 %v41
    %164 = vmatprep.subr.mxu0 %v44
    %165 = vmatpush1.msra.mxu0 %v43
    %166 = vmatprep.subr.mxu0 %v150
    %167 = vmatpush1.msra.mxu0 %v147
    %168 = vmatprep.subr.mxu0 0.0
    %169 = vmatpush1.msra.mxu0 0.0
    %170 = vmatprep.subr.mxu0 0.0
    %171 = vmatpush1.msra.mxu0 0.0
    %172 = vmatprep.subr.mxu0 0.0
    %173 = vmatpush1.msra.mxu0 0.0
    %174 = vmatprep.subr.mxu0 0.0
    %175 = vmatpush1.msra.mxu0 0.0
    %176 = vmatprep.subr.mxu0 0.0
    %177 = vmatpush1.msra.mxu0 0.0
    %178 = vmatprep.subr.mxu0 0.0
    %179 = vmatpush1.msra.mxu0 0.0
    %180 = vmatprep.subr.mxu0 0.0
    %181 = vmatpush1.msra.mxu0 0.0
    %182 = vmatprep.subr.mxu0 0.0
    %183 = vmatpush1.msra.mxu0 0.0
    %184 = vmatprep.subr.mxu0 0.0
    %185 = vmatpush1.msra.mxu0 0.0
    %186 = vmatprep.subr.mxu0 0.0
    %187 = vmatpush1.msra.mxu0 0.0
    %188 = vmatprep.subr.mxu0 0.0
    %189 = vmatpush1.msra.mxu0 0.0
    %190 = vmatprep.subr.mxu0 0.0
    %191 = vmatpush1.msra.mxu0 0.0
    %192 = vmatprep.subr.mxu0 0.0
    %193 = vmatpush1.msra.mxu0 0.0
    %194 = vmatprep.subr.mxu0 0.0
    %195 = vmatpush1.msra.mxu0 0.0
    %196 = vmatprep.subr.mxu0 0.0
    %197 = vmatpush1.msra.mxu0 0.0
    %198 = vmatprep.subr.mxu0 0.0
    %199 = vmatpush1.msra.mxu0 0.0
    %200 = vmatprep.subr.mxu0 0.0
    %201 = vmatpush1.msra.mxu0 0.0
    %202 = vmatprep.subr.mxu0 0.0
    %203 = vmatpush1.msra.mxu0 0.0
    %204 = vmatprep.subr.mxu0 0.0
    %205 = vmatpush1.msra.mxu0 0.0
    %206 = vmatprep.subr.mxu0 0.0
    %207 = vmatpush1.msra.mxu0 0.0
    %208 = vmatprep.subr.mxu0 0.0
    %209 = vmatpush1.msra.mxu0 0.0
    %210 = vmatprep.subr.mxu0 0.0
    %211 = vmatpush1.msra.mxu0 0.0
    %212 = vmatprep.subr.mxu0 0.0
    %213 = vmatpush1.msra.mxu0 0.0
    %214 = vmatprep.subr.mxu0 0.0
    %215 = vmatpush1.msra.mxu0 0.0
    %216 = vmatprep.mubr.f32.mxu0 0.0
    %217 = vmatmul.mubr.f32.gmra.mrb[0].mxu0 %v143
    %v218 = vpop.f32.mrb[0].mxu0
    %v219 = vadd.f32 0.0, %v218
    %v220 = vpop.f32.mrb[0].mxu0
    %v221 = vadd.f32 0.0, %v220
    %222 = vdwg.mxu0
    %v223 = vmul.f32 %v219, %v219
    %224 = vadd.xlane.f32.xlu0 %v223
    %v225 = vpop.xlane.xlu0 %224
    %v226 = vmax.f32 %v225, 1e-24
    %v227 = vrsqrt.pop %v226
    %v228 = vmul.f32 %v221, %v221
    %229 = vadd.xlane.f32.xlu0 %v228
    %v230 = vpop.xlane.xlu0 %229
    %v231 = vmax.f32 %v230, 1e-24
    %v232 = vrsqrt.pop %v231
    %v233 = vmul.f32 %v219, %v227
    %v234 = vmul.f32 %v221, %v232
    %235 = vmatprep.subr.mxu0 0.0
    %236 = vmatpush1.xpose.msra.mxu0 %v234
    %237 = vmatprep.subr.mxu0 0.0
    %238 = vmatpush1.xpose.msra.mxu0 0.0
    %239 = vmatprep.subr.mxu0 0.0
    %240 = vmatpush1.xpose.msra.mxu0 0.0
    %241 = vmatprep.subr.mxu0 0.0
    %242 = vmatpush1.xpose.msra.mxu0 0.0
    %243 = vmatprep.subr.mxu0 0.0
    %244 = vmatpush1.xpose.msra.mxu0 0.0
    %245 = vmatprep.subr.mxu0 0.0
    %246 = vmatpush1.xpose.msra.mxu0 0.0
    %247 = vmatprep.subr.mxu0 0.0
    %248 = vmatpush1.xpose.msra.mxu0 0.0
    %249 = vmatprep.subr.mxu0 0.0
    %250 = vmatpush1.xpose.msra.mxu0 0.0
    %251 = vmatprep.subr.mxu0 0.0
    %252 = vmatpush1.xpose.msra.mxu0 0.0
    %253 = vmatprep.subr.mxu0 0.0
    %254 = vmatpush1.xpose.msra.mxu0 0.0
    %255 = vmatprep.subr.mxu0 0.0
    %256 = vmatpush1.xpose.msra.mxu0 0.0
    %257 = vmatprep.subr.mxu0 0.0
    %258 = vmatpush1.xpose.msra.mxu0 0.0
    %259 = vmatprep.subr.mxu0 0.0
    %260 = vmatpush1.xpose.msra.mxu0 0.0
    %261 = vmatprep.subr.mxu0 0.0
    %262 = vmatpush1.xpose.msra.mxu0 0.0
    %263 = vmatprep.subr.mxu0 0.0
    %264 = vmatpush1.xpose.msra.mxu0 0.0
    %265 = vmatprep.subr.mxu0 0.0
    %266 = vmatpush1.xpose.msra.mxu0 0.0
    %267 = vmatprep.subr.mxu0 0.0
    %268 = vmatpush1.xpose.msra.mxu0 0.0
    %269 = vmatprep.subr.mxu0 0.0
    %270 = vmatpush1.xpose.msra.mxu0 0.0
    %271 = vmatprep.subr.mxu0 0.0
    %272 = vmatpush1.xpose.msra.mxu0 0.0
    %273 = vmatprep.subr.mxu0 0.0
    %274 = vmatpush1.xpose.msra.mxu0 0.0
    %275 = vmatprep.subr.mxu0 0.0
    %276 = vmatpush1.xpose.msra.mxu0 0.0
    %277 = vmatprep.subr.mxu0 0.0
    %278 = vmatpush1.xpose.msra.mxu0 0.0
    %279 = vmatprep.subr.mxu0 0.0
    %280 = vmatpush1.xpose.msra.mxu0 0.0
    %281 = vmatprep.subr.mxu0 0.0
    %282 = vmatpush1.xpose.msra.mxu0 0.0
    %283 = vmatprep.subr.mxu0 0.0
    %284 = vmatpush1.xpose.msra.mxu0 0.0
    %285 = vmatprep.subr.mxu0 0.0
    %286 = vmatpush1.xpose.msra.mxu0 0.0
    %287 = vmatprep.subr.mxu0 0.0
    %288 = vmatpush1.xpose.msra.mxu0 0.0
    %289 = vmatprep.subr.mxu0 0.0
    %290 = vmatpush1.xpose.msra.mxu0 0.0
    %291 = vmatprep.subr.mxu0 0.0
    %292 = vmatpush1.xpose.msra.mxu0 0.0
    %293 = vmatprep.subr.mxu0 0.0
    %294 = vmatpush1.xpose.msra.mxu0 0.0
    %295 = vmatprep.subr.mxu0 0.0
    %296 = vmatpush1.xpose.msra.mxu0 0.0
    %297 = vmatprep.subr.mxu0 0.0
    %298 = vmatpush1.xpose.msra.mxu0 0.0
    %299 = vmatprep.mubr.f32.mxu0 0.0
    %300 = vmatmul.mubr.f32.gmra.mrb[0].mxu0 %v233
    %v301 = vpop.f32.mrb[0].mxu0
    %v302 = vadd.f32 0.0, %v301
    %v303 = vpop.f32.mrb[0].mxu0
    %304 = vdwg.mxu0
    %v305 = vmul.f32 %v302, 10.0
    %vm306 = vcmask 64512
    %307 = vst.msk [vmem:[#allocation2] sm:$0xff] %vm306, %v305
    %v308 = vmul.f32 %v302, 100.0
    %v309 = vmul.f32 %v233, %v234
    %310 = vadd.xlane.f32.xlu0 %v309
    %v311 = vpop.xlane.xlu0 %310
    %v312 = vmul.f32 %v311, 100.0
    %v313 = vsel %vm306, %v308, -inf
    %314 = vmax.xlane.f32.xlu0 %v313
    %v315 = vpop.xlane.xlu0 %314
    %v316 = vsub.f32 %v308, %v315
    %v317 = vmul.f32 %v316, 1.442695
    %v318 = vpow.pop %v317
    %v319 = vsel %vm306, %v318, 0.0
    %320 = vadd.xlane.f32.xlu0 %v319
    %v321 = vpop.xlane.xlu0 %320
    %v322 = vlog2.pop %v321
    %v323 = vmul.f32 %v322, 0.6931472
    %v324 = vadd.f32 %v323, %v315
    %v325 = vsub.f32 %v324, %v312
    %vm326 = vcmask 7168
    %v327 = vsel %vm326, %v325, 0.0
    %328 = vadd.xlane.f32.xlu0 %v327
    %v329 = vpop.xlane.xlu0 %328
    %v330 = vrot.slane %v329, 4
    %v331 = vadd.f32 %v329, %v330
    %v332 = vrot.slane %v331, 2
    %v333 = vadd.f32 %v331, %v332
    %v334 = vrot.slane %v333, 1
    %v335 = vadd.f32 %v333, %v334
    %s336 = vtos %v335
    %v337 = vstv %s336
    %v338 = vrcp.pop 8.0
    %v339 = vmul.f32 %v337, %v338
    %vm340 = vcmask 0
    %341 = vst.msk [vmem:[#allocation4] sm:$0x1] %vm340, %v339
    // Predicated region
    $region10: #{tpu_custom_call.1} parent=1 // pred_check
      _
    $region11: #{tpu_custom_call.1} parent=1 // pred_check_branch
      %343 = sbr.rel (0) target = $region13
    $region12: #{tpu_custom_call.1} parent=1 // pred_region
      %s345 = ssub.s32 128, 128
      %346 = vsyncadd [#allocation3], %s345
      %s348 = sshll.u32 [#allocation2], 4
      %s349 = int_to_ptr.vmem [resolvable:$true] %s348
      %351 = dma.vmem_to_hbm [thread:$0]  %s349, 128, %s2, [#allocation3]
    $region13: #{tpu_custom_call.1} parent=1 // pred_fallthru
      _
    // Predicated region
    $region14: #{tpu_custom_call.1} parent=1 // pred_check
      _
    $region15: #{tpu_custom_call.1} parent=1 // pred_check_branch
      %353 = sbr.rel (0) target = $region17
    $region16: #{tpu_custom_call.1} parent=1 // pred_region
      %s355 = ssub.s32 16, 16
      %356 = vsyncadd [#allocation5], %s355
      %s358 = sshll.u32 [#allocation4], 4
      %s359 = int_to_ptr.vmem [resolvable:$true] %s358
      %361 = dma.vmem_to_hbm [thread:$0]  %s359, 16, %s3, [#allocation5]
    $region17: #{tpu_custom_call.1} parent=1 // pred_fallthru
      _
    // Predicated region
    $region18: #{tpu_custom_call.1} parent=1 // pred_check
      _
    $region19: #{tpu_custom_call.1} parent=1 // pred_check_branch
      %363 = sbr.rel (0) target = $region21
    $region20: #{tpu_custom_call.1} parent=1 // pred_region
      %364 = dma.done [#allocation3], 128
    $region21: #{tpu_custom_call.1} parent=1 // pred_fallthru
      _
    // Predicated region
    $region22: #{tpu_custom_call.1} parent=1 // pred_check
      _
    $region23: #{tpu_custom_call.1} parent=1 // pred_check_branch
      %366 = sbr.rel (0) target = $region25
    $region24: #{tpu_custom_call.1} parent=1 // pred_region
      %367 = dma.done [#allocation5], 16
    $region25: #{tpu_custom_call.1} parent=1 // pred_fallthru
      _
    %368 = vsyncpa [#allocation3], 1
    %369 = vsyncpa [#allocation5], 1

</llo_original>
